<compile_context>
chip_gen: v7x
topology: tpu7x:2x2x1
jax: 0.10.0
libtpu: 0.0.40
codegen_flags: <defaults>
</compile_context>

<pallas_src>
import functools

import jax
import jax.numpy as jnp
from jax.experimental import pallas as pl
from jax.experimental.pallas import tpu as pltpu

_LANE = 128


def _round_up(x, m):
    return (x + m - 1) // m * m


def _mlp_kernel(x_ref, w1_ref, w2_ref, w3_ref, w4_ref, b_ref, o_ref):
    """Fused 4x (linear + ReLU). x: (tm, K); wN: (pin, pout); b: (8, Pmax); o: (tm, p4)."""
    h = jnp.dot(x_ref[...], w1_ref[...], preferred_element_type=jnp.float32)
    h = jnp.maximum(h + b_ref[0:1, : w1_ref.shape[1]], 0.0)

    h = jnp.dot(h, w2_ref[...], preferred_element_type=jnp.float32)
    h = jnp.maximum(h + b_ref[1:2, : w2_ref.shape[1]], 0.0)

    h = jnp.dot(h, w3_ref[...], preferred_element_type=jnp.float32)
    h = jnp.maximum(h + b_ref[2:3, : w3_ref.shape[1]], 0.0)

    h = jnp.dot(h, w4_ref[...], preferred_element_type=jnp.float32)
    h = jnp.maximum(h + b_ref[3:4, : w4_ref.shape[1]], 0.0)

    o_ref[...] = h.astype(o_ref.dtype)


@functools.partial(jax.jit, static_argnames=("max_tile_m",))
def custom_net_forward(x, params, *, max_tile_m=512):
    """Fused forward pass. x: (M, 784); params: 4 x (W (in,out), b (1,out))."""
    (w1, b1), (w2, b2), (w3, b3), (w4, b4) = params
    M, K = x.shape
    n1, n2, n3, n4 = w1.shape[1], w2.shape[1], w3.shape[1], w4.shape[1]
    dtype = x.dtype

    # Pad every hidden/output feature dim up to a lane multiple (128).
    p1, p2, p3, p4 = (_round_up(n, _LANE) for n in (n1, n2, n3, n4))
    pmax = max(p1, p2, p3, p4)

    w1p = jnp.pad(w1, ((0, 0), (0, p1 - n1)))
    w2p = jnp.pad(w2, ((0, p1 - w2.shape[0]), (0, p2 - n2)))
    w3p = jnp.pad(w3, ((0, p2 - w3.shape[0]), (0, p3 - n3)))
    w4p = jnp.pad(w4, ((0, p3 - w4.shape[0]), (0, p4 - n4)))

    def _pad_bias(b):
        b = b.reshape(1, -1)
        return jnp.pad(b, ((0, 0), (0, pmax - b.shape[1])))

    # Pack the 4 biases into one lane-dense (8, pmax) buffer (full sublane tile).
    b_all = jnp.concatenate([_pad_bias(b1), _pad_bias(b2), _pad_bias(b3), _pad_bias(b4)], axis=0)
    b_all = jnp.pad(b_all, ((0, 8 - b_all.shape[0]), (0, 0)))

    # Tile / pad the batch dimension.
    m_pad = _round_up(max(M, 8), 8)
    tm = min(max_tile_m, m_pad)
    m_pad = _round_up(m_pad, tm)
    x_pad = jnp.pad(x, ((0, m_pad - M), (0, 0)))
    grid = (m_pad // tm,)

    flops = 2 * m_pad * (K * p1 + p1 * p2 + p2 * p3 + p3 * p4)
    bytes_accessed = 4 * (
        x_pad.size + w1p.size + w2p.size + w3p.size + w4p.size + b_all.size + m_pad * p4
    )
    cost = pl.CostEstimate(flops=flops, transcendentals=0, bytes_accessed=bytes_accessed)

    out_pad = pl.pallas_call(
        _mlp_kernel,
        out_shape=jax.ShapeDtypeStruct((m_pad, p4), dtype),
        grid=grid,
        in_specs=[
            pl.BlockSpec((tm, K), lambda i: (i, 0)),        # activations: tiled over batch
            pl.BlockSpec((K, p1), lambda i: (0, 0)),        # weights/biases: VMEM-resident
            pl.BlockSpec((p1, p2), lambda i: (0, 0)),
            pl.BlockSpec((p2, p3), lambda i: (0, 0)),
            pl.BlockSpec((p3, p4), lambda i: (0, 0)),
            pl.BlockSpec((8, pmax), lambda i: (0, 0)),
        ],
        out_specs=pl.BlockSpec((tm, p4), lambda i: (i, 0)),
        compiler_params=pltpu.CompilerParams(dimension_semantics=("parallel",)),
        cost_estimate=cost,
    )(x_pad, w1p, w2p, w3p, w4p, b_all)

    return out_pad[:M, :n4]


def init_params(key, input_size, layer_widths, output_size, dtype=jnp.float32):
    """Deterministic init mimicking PyTorch nn.Linear default: U(-1/sqrt(fan_in), 1/sqrt(fan_in))."""
    sizes = [input_size] + list(layer_widths) + [output_size]
    params = []
    for i in range(len(sizes) - 1):
        fan_in, fan_out = sizes[i], sizes[i + 1]
        key, kw, kb = jax.random.split(key, 3)
        bound = 1.0 / jnp.sqrt(float(fan_in))
        w = jax.random.uniform(kw, (fan_in, fan_out), dtype, -bound, bound)  # (in, out)
        b = jax.random.uniform(kb, (1, fan_out), dtype, -bound, bound)
        params.append((w, b))
    return params


def custom_net_reference(x, params):
    # Pure-JAX reference for sanity checking.
    for w, b in params:
        x = jnp.maximum(x @ w + b, 0.0)
    return x


if __name__ == "__main__":
    input_size = 28 * 28
    layer_widths = [128, 64, 32]
    output_size = 10
    batch = 8

    key = jax.random.PRNGKey(0)
    key, kx = jax.random.split(key)
    x = jax.random.normal(kx, (batch, input_size), jnp.float32)

    params = init_params(key, input_size, layer_widths, output_size)

    out = jax.block_until_ready(custom_net_forward(x, params))
    ref = jax.block_until_ready(custom_net_reference(x, params))

    assert out.shape == (batch, output_size), out.shape
    assert jnp.allclose(out, ref, atol=1e-5, rtol=1e-5), "mismatch vs reference"

    print("KERNEL_OK")
</pallas_src>

<mosaic_0001>
module attributes {stable_mosaic.version = 11 : i64} {
  func.func @_mlp_kernel(%arg0: i32, %arg1: memref<8x784xf32, #tpu.memory_space<vmem>>, %arg2: memref<784x128xf32, #tpu.memory_space<vmem>>, %arg3: memref<128x128xf32, #tpu.memory_space<vmem>>, %arg4: memref<128x128xf32, #tpu.memory_space<vmem>>, %arg5: memref<128x128xf32, #tpu.memory_space<vmem>>, %arg6: memref<8x128xf32, #tpu.memory_space<vmem>>, %arg7: memref<8x128xf32, #tpu.memory_space<vmem>>) attributes {dimension_semantics = [#tpu.dimension_semantics<parallel>], iteration_bounds = array<i64: 1>, scalar_prefetch = 0 : i64, scratch_operands = 0 : i64, tpu.core_type = #tpu.core_type<tc>, window_params = [{transform_indices = @transform_0, window_bounds = array<i64: 8, 784>}, {pipeline_mode = #tpu.pipeline_mode<synchronous>, transform_indices = @transform_1, window_bounds = array<i64: 784, 128>}, {pipeline_mode = #tpu.pipeline_mode<synchronous>, transform_indices = @transform_2, window_bounds = array<i64: 128, 128>}, {pipeline_mode = #tpu.pipeline_mode<synchronous>, transform_indices = @transform_3, window_bounds = array<i64: 128, 128>}, {pipeline_mode = #tpu.pipeline_mode<synchronous>, transform_indices = @transform_4, window_bounds = array<i64: 128, 128>}, {pipeline_mode = #tpu.pipeline_mode<synchronous>, transform_indices = @transform_5, window_bounds = array<i64: 8, 128>}, {transform_indices = @transform_6, window_bounds = array<i64: 8, 128>}]} {
    %c0 = arith.constant 0 : index
    %c0_0 = arith.constant 0 : index
    %0 = vector.load %arg1[%c0, %c0_0] : memref<8x784xf32, #tpu.memory_space<vmem>>, vector<8x784xf32>
    %c0_1 = arith.constant 0 : index
    %c0_2 = arith.constant 0 : index
    %1 = vector.load %arg2[%c0_1, %c0_2] : memref<784x128xf32, #tpu.memory_space<vmem>>, vector<784x128xf32>
    %cst = arith.constant dense<0.000000e+00> : vector<8x128xf32>
    %2 = tpu.matmul %0, %1, %cst {dimension_numbers = #tpu.dot_dimension_numbers<[1], [0], [0], [1], [0, 0, 1, 1], [], []>} : vector<8x784xf32>, vector<784x128xf32>, vector<8x128xf32> -> vector<8x128xf32>
    %c0_3 = arith.constant 0 : index
    %c0_4 = arith.constant 0 : index
    %3 = vector.load %arg6[%c0_3, %c0_4] : memref<8x128xf32, #tpu.memory_space<vmem>>, vector<1x128xf32>
    %4 = vector.broadcast %3 : vector<1x128xf32> to vector<8x128xf32>
    %5 = arith.addf %2, %4 : vector<8x128xf32>
    %cst_5 = arith.constant 0.000000e+00 : f32
    %6 = vector.broadcast %cst_5 : f32 to vector<8x128xf32>
    %7 = arith.maximumf %5, %6 : vector<8x128xf32>
    %c0_6 = arith.constant 0 : index
    %c0_7 = arith.constant 0 : index
    %8 = vector.load %arg3[%c0_6, %c0_7] : memref<128x128xf32, #tpu.memory_space<vmem>>, vector<128x128xf32>
    %cst_8 = arith.constant dense<0.000000e+00> : vector<8x128xf32>
    %9 = tpu.matmul %7, %8, %cst_8 {dimension_numbers = #tpu.dot_dimension_numbers<[1], [0], [0], [1], [0, 0, 1, 1], [], []>} : vector<8x128xf32>, vector<128x128xf32>, vector<8x128xf32> -> vector<8x128xf32>
    %c1 = arith.constant 1 : index
    %c0_9 = arith.constant 0 : index
    %10 = vector.load %arg6[%c1, %c0_9] : memref<8x128xf32, #tpu.memory_space<vmem>>, vector<1x128xf32>
    %11 = vector.broadcast %10 : vector<1x128xf32> to vector<8x128xf32>
    %12 = arith.addf %9, %11 : vector<8x128xf32>
    %cst_10 = arith.constant 0.000000e+00 : f32
    %13 = vector.broadcast %cst_10 : f32 to vector<8x128xf32>
    %14 = arith.maximumf %12, %13 : vector<8x128xf32>
    %c0_11 = arith.constant 0 : index
    %c0_12 = arith.constant 0 : index
    %15 = vector.load %arg4[%c0_11, %c0_12] : memref<128x128xf32, #tpu.memory_space<vmem>>, vector<128x128xf32>
    %cst_13 = arith.constant dense<0.000000e+00> : vector<8x128xf32>
    %16 = tpu.matmul %14, %15, %cst_13 {dimension_numbers = #tpu.dot_dimension_numbers<[1], [0], [0], [1], [0, 0, 1, 1], [], []>} : vector<8x128xf32>, vector<128x128xf32>, vector<8x128xf32> -> vector<8x128xf32>
    %c2 = arith.constant 2 : index
    %c0_14 = arith.constant 0 : index
    %17 = vector.load %arg6[%c2, %c0_14] : memref<8x128xf32, #tpu.memory_space<vmem>>, vector<1x128xf32>
    %18 = vector.broadcast %17 : vector<1x128xf32> to vector<8x128xf32>
    %19 = arith.addf %16, %18 : vector<8x128xf32>
    %cst_15 = arith.constant 0.000000e+00 : f32
    %20 = vector.broadcast %cst_15 : f32 to vector<8x128xf32>
    %21 = arith.maximumf %19, %20 : vector<8x128xf32>
    %c0_16 = arith.constant 0 : index
    %c0_17 = arith.constant 0 : index
    %22 = vector.load %arg5[%c0_16, %c0_17] : memref<128x128xf32, #tpu.memory_space<vmem>>, vector<128x128xf32>
    %cst_18 = arith.constant dense<0.000000e+00> : vector<8x128xf32>
    %23 = tpu.matmul %21, %22, %cst_18 {dimension_numbers = #tpu.dot_dimension_numbers<[1], [0], [0], [1], [0, 0, 1, 1], [], []>} : vector<8x128xf32>, vector<128x128xf32>, vector<8x128xf32> -> vector<8x128xf32>
    %c3 = arith.constant 3 : index
    %c0_19 = arith.constant 0 : index
    %24 = vector.load %arg6[%c3, %c0_19] : memref<8x128xf32, #tpu.memory_space<vmem>>, vector<1x128xf32>
    %25 = vector.broadcast %24 : vector<1x128xf32> to vector<8x128xf32>
    %26 = arith.addf %23, %25 : vector<8x128xf32>
    %cst_20 = arith.constant 0.000000e+00 : f32
    %27 = vector.broadcast %cst_20 : f32 to vector<8x128xf32>
    %28 = arith.maximumf %26, %27 : vector<8x128xf32>
    %c0_21 = arith.constant 0 : index
    %c0_22 = arith.constant 0 : index
    %29 = vector.load %arg7[%c0_21, %c0_22] : memref<8x128xf32, #tpu.memory_space<vmem>>, vector<8x128xf32>
    tpu.vector_store %arg7[%c0_21, %c0_22], %28 {strides = array<i32>} : memref<8x128xf32, #tpu.memory_space<vmem>>, vector<8x128xf32>,
    return
  }
  func.func @transform_0(%arg0: i32) -> (i32, i32) {
    %c0_i32 = arith.constant 0 : i32
    %c0_i32_0 = arith.constant 0 : i32
    return %arg0, %c0_i32 : i32, i32
  }
  func.func @transform_1(%arg0: i32) -> (i32, i32) {
    %c0_i32 = arith.constant 0 : i32
    %c0_i32_0 = arith.constant 0 : i32
    %c0_i32_1 = arith.constant 0 : i32
    return %c0_i32, %c0_i32_0 : i32, i32
  }
  func.func @transform_2(%arg0: i32) -> (i32, i32) {
    %c0_i32 = arith.constant 0 : i32
    %c0_i32_0 = arith.constant 0 : i32
    %c0_i32_1 = arith.constant 0 : i32
    return %c0_i32, %c0_i32_0 : i32, i32
  }
  func.func @transform_3(%arg0: i32) -> (i32, i32) {
    %c0_i32 = arith.constant 0 : i32
    %c0_i32_0 = arith.constant 0 : i32
    %c0_i32_1 = arith.constant 0 : i32
    return %c0_i32, %c0_i32_0 : i32, i32
  }
  func.func @transform_4(%arg0: i32) -> (i32, i32) {
    %c0_i32 = arith.constant 0 : i32
    %c0_i32_0 = arith.constant 0 : i32
    %c0_i32_1 = arith.constant 0 : i32
    return %c0_i32, %c0_i32_0 : i32, i32
  }
  func.func @transform_5(%arg0: i32) -> (i32, i32) {
    %c0_i32 = arith.constant 0 : i32
    %c0_i32_0 = arith.constant 0 : i32
    %c0_i32_1 = arith.constant 0 : i32
    return %c0_i32, %c0_i32_0 : i32, i32
  }
  func.func @transform_6(%arg0: i32) -> (i32, i32) {
    %c0_i32 = arith.constant 0 : i32
    %c0_i32_0 = arith.constant 0 : i32
    return %arg0, %c0_i32 : i32, i32
  }
}

</mosaic_0001>

<llo_original>
// kernel: custom_net_forward.1
$region0: #{custom_net_forward.1}
  #allocation0 [shape = 'u32[]', space=smem, size = 0x4, offset = 0x4, fixed_abs, tag = 'smem constant byte address 0x4 - core index']
  #allocation1 [shape = 'u32[144,128]{1,0:T(1,128)}', space=vmem, size = 0x12000, scoped, tag = 'internal scratch']
  %s0 = inlined_call_operand.vmem [shape: f32[8,784], index: 0, kind: input, shape index: {}]
  %s1 = inlined_call_operand.vmem [shape: f32[784,128], index: 1, kind: input, shape index: {}]
  %s2 = inlined_call_operand.vmem [shape: f32[128,128], index: 2, kind: input, shape index: {}]
  %s3 = inlined_call_operand.vmem [shape: f32[128,128], index: 3, kind: input, shape index: {}]
  %s4 = inlined_call_operand.vmem [shape: f32[128,128], index: 4, kind: input, shape index: {}]
  %s5 = inlined_call_operand.vmem [shape: f32[8,128], index: 5, kind: input, shape index: {}]
  %s6 = inlined_call_operand.hbm [shape: f32[8,128], index: 6, kind: output, shape index: {}]
  %s7 = sld [smem:[#allocation0]]
  $region34: #{custom_net_forward.1} parent=0
    _
  %s9 = ssub.s32 1, %s7
  %s10 = scalar_select 0, %s9, %s7
  $region1: #{custom_net_forward.1} parent=0
    #allocation2 [shape = 'u8[4096]{0}', space=vmem, size = 0x1000, scoped, tag = 'output window, operand 0, single buffered']
    #allocation3 [shape = 's32[1]{0}', space=sflag, size = 0x4, scoped, tag = 'scoped memory for custom_net_forward.1']
    %11 = vsyncpa [#allocation3], 0
    // Predicated region
    $region2: #{custom_net_forward.1} parent=1 // pred_check
      _
    $region3: #{custom_net_forward.1} parent=1 // pred_check_branch
      %13 = sbr.rel (0) target = $region5
    $region4: #{custom_net_forward.1} parent=1 // pred_region
      _
    $region5: #{custom_net_forward.1} parent=1 // pred_fallthru
      _
    // Predicated region
    $region6: #{custom_net_forward.1} parent=1 // pred_check
      _
    $region7: #{custom_net_forward.1} parent=1 // pred_check_branch
      %15 = sbr.rel (0) target = $region9
    $region8: #{custom_net_forward.1} parent=1 // pred_region
      _
    $region9: #{custom_net_forward.1} parent=1 // pred_fallthru
      _
    // Predicated region
    $region10: #{custom_net_forward.1} parent=1 // pred_check
      _
    $region11: #{custom_net_forward.1} parent=1 // pred_check_branch
      %17 = sbr.rel (0) target = $region13
    $region12: #{custom_net_forward.1} parent=1 // pred_region
      _
    $region13: #{custom_net_forward.1} parent=1 // pred_fallthru
      _
    // Predicated region
    $region14: #{custom_net_forward.1} parent=1 // pred_check
      _
    $region15: #{custom_net_forward.1} parent=1 // pred_check_branch
      %19 = sbr.rel (0) target = $region17
    $region16: #{custom_net_forward.1} parent=1 // pred_region
      _
    $region17: #{custom_net_forward.1} parent=1 // pred_fallthru
      _
    // Predicated region
    $region18: #{custom_net_forward.1} parent=1 // pred_check
      _
    $region19: #{custom_net_forward.1} parent=1 // pred_check_branch
      %21 = sbr.rel (0) target = $region21
    $region20: #{custom_net_forward.1} parent=1 // pred_region
      _
    $region21: #{custom_net_forward.1} parent=1 // pred_fallthru
      _
    // Predicated region
    $region22: #{custom_net_forward.1} parent=1 // pred_check
      _
    $region23: #{custom_net_forward.1} parent=1 // pred_check_branch
      %23 = sbr.rel (0) target = $region25
    $region24: #{custom_net_forward.1} parent=1 // pred_region
      _
    $region25: #{custom_net_forward.1} parent=1 // pred_fallthru
      _
    %v24 = vld [vmem:[%s0] sm:$0xff]
    %v25 = vld [vmem:[%s0 + $0x8] sm:$0xff]
    %v26 = vld [vmem:[%s0 + $0x10] sm:$0xff]
    %v27 = vld [vmem:[%s0 + $0x18] sm:$0xff]
    %v28 = vld [vmem:[%s0 + $0x20] sm:$0xff]
    %v29 = vld [vmem:[%s0 + $0x28] sm:$0xff]
    %v30 = vld [vmem:[%s0 + $0x30] sm:$0xff]
    %v31 = vld [vmem:[%s1] sm:$0xff]
    %v32 = vld [vmem:[%s1 + $0x8] sm:$0xff]
    %v33 = vld [vmem:[%s1 + $0x10] sm:$0xff]
    %v34 = vld [vmem:[%s1 + $0x18] sm:$0xff]
    %v35 = vld [vmem:[%s1 + $0x20] sm:$0xff]
    %v36 = vld [vmem:[%s1 + $0x28] sm:$0xff]
    %v37 = vld [vmem:[%s1 + $0x30] sm:$0xff]
    %v38 = vld [vmem:[%s1 + $0x38] sm:$0xff]
    %v39 = vld [vmem:[%s1 + $0x40] sm:$0xff]
    %v40 = vld [vmem:[%s1 + $0x48] sm:$0xff]
    %v41 = vld [vmem:[%s1 + $0x50] sm:$0xff]
    %v42 = vld [vmem:[%s1 + $0x58] sm:$0xff]
    %v43 = vld [vmem:[%s1 + $0x60] sm:$0xff]
    %v44 = vld [vmem:[%s1 + $0x68] sm:$0xff]
    %v45 = vld [vmem:[%s1 + $0x70] sm:$0xff]
    %v46 = vld [vmem:[%s1 + $0x78] sm:$0xff]
    %v47 = vld [vmem:[%s1 + $0x80] sm:$0xff]
    %v48 = vld [vmem:[%s1 + $0x88] sm:$0xff]
    %v49 = vld [vmem:[%s1 + $0x90] sm:$0xff]
    %v50 = vld [vmem:[%s1 + $0x98] sm:$0xff]
    %v51 = vld [vmem:[%s1 + $0xa0] sm:$0xff]
    %v52 = vld [vmem:[%s1 + $0xa8] sm:$0xff]
    %v53 = vld [vmem:[%s1 + $0xb0] sm:$0xff]
    %v54 = vld [vmem:[%s1 + $0xb8] sm:$0xff]
    %v55 = vld [vmem:[%s1 + $0xc0] sm:$0xff]
    %v56 = vld [vmem:[%s1 + $0xc8] sm:$0xff]
    %v57 = vld [vmem:[%s1 + $0xd0] sm:$0xff]
    %v58 = vld [vmem:[%s1 + $0xd8] sm:$0xff]
    %v59 = vld [vmem:[%s1 + $0xe0] sm:$0xff]
    %v60 = vld [vmem:[%s1 + $0xe8] sm:$0xff]
    %v61 = vld [vmem:[%s1 + $0xf0] sm:$0xff]
    %v62 = vld [vmem:[%s1 + $0xf8] sm:$0xff]
    %v63 = vld [vmem:[%s1 + $0x100] sm:$0xff]
    %v64 = vld [vmem:[%s1 + $0x108] sm:$0xff]
    %v65 = vld [vmem:[%s1 + $0x110] sm:$0xff]
    %v66 = vld [vmem:[%s1 + $0x118] sm:$0xff]
    %v67 = vld [vmem:[%s1 + $0x120] sm:$0xff]
    %v68 = vld [vmem:[%s1 + $0x128] sm:$0xff]
    %v69 = vld [vmem:[%s1 + $0x130] sm:$0xff]
    %v70 = vld [vmem:[%s1 + $0x138] sm:$0xff]
    %v71 = vld [vmem:[%s1 + $0x140] sm:$0xff]
    %v72 = vld [vmem:[%s1 + $0x148] sm:$0xff]
    %v73 = vld [vmem:[%s1 + $0x150] sm:$0xff]
    %v74 = vld [vmem:[%s1 + $0x158] sm:$0xff]
    %v75 = vld [vmem:[%s1 + $0x160] sm:$0xff]
    %v76 = vld [vmem:[%s1 + $0x168] sm:$0xff]
    %v77 = vld [vmem:[%s1 + $0x170] sm:$0xff]
    %v78 = vld [vmem:[%s1 + $0x178] sm:$0xff]
    %v79 = vld [vmem:[%s1 + $0x180] sm:$0xff]
    %v80 = vld [vmem:[%s1 + $0x188] sm:$0xff]
    %v81 = vld [vmem:[%s1 + $0x190] sm:$0xff]
    %v82 = vld [vmem:[%s1 + $0x198] sm:$0xff]
    %v83 = vld [vmem:[%s1 + $0x1a0] sm:$0xff]
    %v84 = vld [vmem:[%s1 + $0x1a8] sm:$0xff]
    %v85 = vld [vmem:[%s1 + $0x1b0] sm:$0xff]
    %v86 = vld [vmem:[%s1 + $0x1b8] sm:$0xff]
    %v87 = vld [vmem:[%s1 + $0x1c0] sm:$0xff]
    %v88 = vld [vmem:[%s1 + $0x1c8] sm:$0xff]
    %v89 = vld [vmem:[%s1 + $0x1d0] sm:$0xff]
    %v90 = vld [vmem:[%s1 + $0x1d8] sm:$0xff]
    %v91 = vld [vmem:[%s1 + $0x1e0] sm:$0xff]
    %v92 = vld [vmem:[%s1 + $0x1e8] sm:$0xff]
    %v93 = vld [vmem:[%s1 + $0x1f0] sm:$0xff]
    %v94 = vld [vmem:[%s1 + $0x1f8] sm:$0xff]
    %v95 = vld [vmem:[%s1 + $0x200] sm:$0xff]
    %v96 = vld [vmem:[%s1 + $0x208] sm:$0xff]
    %v97 = vld [vmem:[%s1 + $0x210] sm:$0xff]
    %v98 = vld [vmem:[%s1 + $0x218] sm:$0xff]
    %v99 = vld [vmem:[%s1 + $0x220] sm:$0xff]
    %v100 = vld [vmem:[%s1 + $0x228] sm:$0xff]
    %v101 = vld [vmem:[%s1 + $0x230] sm:$0xff]
    %v102 = vld [vmem:[%s1 + $0x238] sm:$0xff]
    %v103 = vld [vmem:[%s1 + $0x240] sm:$0xff]
    %v104 = vld [vmem:[%s1 + $0x248] sm:$0xff]
    %v105 = vld [vmem:[%s1 + $0x250] sm:$0xff]
    %v106 = vld [vmem:[%s1 + $0x258] sm:$0xff]
    %v107 = vld [vmem:[%s1 + $0x260] sm:$0xff]
    %v108 = vld [vmem:[%s1 + $0x268] sm:$0xff]
    %v109 = vld [vmem:[%s1 + $0x270] sm:$0xff]
    %v110 = vld [vmem:[%s1 + $0x278] sm:$0xff]
    %v111 = vld [vmem:[%s1 + $0x280] sm:$0xff]
    %v112 = vld [vmem:[%s1 + $0x288] sm:$0xff]
    %v113 = vld [vmem:[%s1 + $0x290] sm:$0xff]
    %v114 = vld [vmem:[%s1 + $0x298] sm:$0xff]
    %v115 = vld [vmem:[%s1 + $0x2a0] sm:$0xff]
    %v116 = vld [vmem:[%s1 + $0x2a8] sm:$0xff]
    %v117 = vld [vmem:[%s1 + $0x2b0] sm:$0xff]
    %v118 = vld [vmem:[%s1 + $0x2b8] sm:$0xff]
    %v119 = vld [vmem:[%s1 + $0x2c0] sm:$0xff]
    %v120 = vld [vmem:[%s1 + $0x2c8] sm:$0xff]
    %v121 = vld [vmem:[%s1 + $0x2d0] sm:$0xff]
    %v122 = vld [vmem:[%s1 + $0x2d8] sm:$0xff]
    %v123 = vld [vmem:[%s1 + $0x2e0] sm:$0xff]
    %v124 = vld [vmem:[%s1 + $0x2e8] sm:$0xff]
    %v125 = vld [vmem:[%s1 + $0x2f0] sm:$0xff]
    %v126 = vld [vmem:[%s1 + $0x2f8] sm:$0xff]
    %v127 = vld [vmem:[%s1 + $0x300] sm:$0xff]
    %v128 = vld [vmem:[%s1 + $0x308] sm:$0xff]
    %v129 = vld [vmem:[%s5] sm:$0x1]
    %v130 = vlaneseq
    %v131 = vshrl.u32 %v130, 7
    %v132 = vsub.s32 0, %v131
    %v133 = vrot.slane %v129, %v132
    %vm134 = vcmask 130048
    %v136 = vsel %vm134, %v30, 0
    %138 = vmatprep.subr.mxu0 0.0
    %139 = vmatpush1.msra.mxu0 %v31
    %140 = vmatprep.subr.mxu0 0.0
    %141 = vmatpush1.msra.mxu0 %v32
    %142 = vmatprep.subr.mxu0 0.0
    %143 = vmatpush1.msra.mxu0 %v33
    %144 = vmatprep.subr.mxu0 0.0
    %145 = vmatpush1.msra.mxu0 %v34
    %146 = vmatprep.subr.mxu0 0.0
    %147 = vmatpush1.msra.mxu0 %v35
    %148 = vmatprep.subr.mxu0 0.0
    %149 = vmatpush1.msra.mxu0 %v36
    %150 = vmatprep.subr.mxu0 0.0
    %151 = vmatpush1.msra.mxu0 %v37
    %152 = vmatprep.subr.mxu0 0.0
    %153 = vmatpush1.msra.mxu0 %v38
    %154 = vmatprep.subr.mxu0 0.0
    %155 = vmatpush1.msra.mxu0 %v39
    %156 = vmatprep.subr.mxu0 0.0
    %157 = vmatpush1.msra.mxu0 %v40
    %158 = vmatprep.subr.mxu0 0.0
    %159 = vmatpush1.msra.mxu0 %v41
    %160 = vmatprep.subr.mxu0 0.0
    %161 = vmatpush1.msra.mxu0 %v42
    %162 = vmatprep.subr.mxu0 0.0
    %163 = vmatpush1.msra.mxu0 %v43
    %164 = vmatprep.subr.mxu0 0.0
    %165 = vmatpush1.msra.mxu0 %v44
    %166 = vmatprep.subr.mxu0 0.0
    %167 = vmatpush1.msra.mxu0 %v45
    %168 = vmatprep.subr.mxu0 0.0
    %169 = vmatpush1.msra.mxu0 %v46
    %170 = vmatprep.subr.mxu0 0.0
    %171 = vmatpush1.msra.mxu0 %v47
    %172 = vmatprep.subr.mxu0 0.0
    %173 = vmatpush1.msra.mxu0 %v48
    %174 = vmatprep.subr.mxu0 0.0
    %175 = vmatpush1.msra.mxu0 %v49
    %176 = vmatprep.subr.mxu0 0.0
    %177 = vmatpush1.msra.mxu0 %v50
    %178 = vmatprep.subr.mxu0 0.0
    %179 = vmatpush1.msra.mxu0 %v51
    %180 = vmatprep.subr.mxu0 0.0
    %181 = vmatpush1.msra.mxu0 %v52
    %182 = vmatprep.subr.mxu0 0.0
    %183 = vmatpush1.msra.mxu0 %v53
    %184 = vmatprep.subr.mxu0 0.0
    %185 = vmatpush1.msra.mxu0 %v54
    %186 = vmatprep.subr.mxu0 0.0
    %187 = vmatpush1.msra.mxu0 %v55
    %188 = vmatprep.subr.mxu0 0.0
    %189 = vmatpush1.msra.mxu0 %v56
    %190 = vmatprep.subr.mxu0 0.0
    %191 = vmatpush1.msra.mxu0 %v57
    %192 = vmatprep.subr.mxu0 0.0
    %193 = vmatpush1.msra.mxu0 %v58
    %194 = vmatprep.subr.mxu0 0.0
    %195 = vmatpush1.msra.mxu0 %v59
    %196 = vmatprep.subr.mxu0 0.0
    %197 = vmatpush1.msra.mxu0 %v60
    %198 = vmatprep.subr.mxu0 0.0
    %199 = vmatpush1.msra.mxu0 %v61
    %200 = vmatprep.subr.mxu0 0.0
    %201 = vmatpush1.msra.mxu0 %v62
    %202 = vmatprep.mubr.f32.mxu0 %v25
    %203 = vmatmul.mubr.f32.gmra.mrb[0].mxu0 %v24
    %v204 = vpop.f32.mrb[0].mxu0
    %v205 = vadd.f32 %v133, %v204
    %v206 = vpop.f32.mrb[0].mxu0
    %207 = vdwg.mxu0
    %208 = vmatprep.subr.mxu0 0.0
    %209 = vmatpush1.msra.mxu0 %v63
    %210 = vmatprep.subr.mxu0 0.0
    %211 = vmatpush1.msra.mxu0 %v64
    %212 = vmatprep.subr.mxu0 0.0
    %213 = vmatpush1.msra.mxu0 %v65
    %214 = vmatprep.subr.mxu0 0.0
    %215 = vmatpush1.msra.mxu0 %v66
    %216 = vmatprep.subr.mxu0 0.0
    %217 = vmatpush1.msra.mxu0 %v67
    %218 = vmatprep.subr.mxu0 0.0
    %219 = vmatpush1.msra.mxu0 %v68
    %220 = vmatprep.subr.mxu0 0.0
    %221 = vmatpush1.msra.mxu0 %v69
    %222 = vmatprep.subr.mxu0 0.0
    %223 = vmatpush1.msra.mxu0 %v70
    %224 = vmatprep.subr.mxu0 0.0
    %225 = vmatpush1.msra.mxu0 %v71
    %226 = vmatprep.subr.mxu0 0.0
    %227 = vmatpush1.msra.mxu0 %v72
    %228 = vmatprep.subr.mxu0 0.0
    %229 = vmatpush1.msra.mxu0 %v73
    %230 = vmatprep.subr.mxu0 0.0
    %231 = vmatpush1.msra.mxu0 %v74
    %232 = vmatprep.subr.mxu0 0.0
    %233 = vmatpush1.msra.mxu0 %v75
    %234 = vmatprep.subr.mxu0 0.0
    %235 = vmatpush1.msra.mxu0 %v76
    %236 = vmatprep.subr.mxu0 0.0
    %237 = vmatpush1.msra.mxu0 %v77
    %238 = vmatprep.subr.mxu0 0.0
    %239 = vmatpush1.msra.mxu0 %v78
    %240 = vmatprep.subr.mxu0 0.0
    %241 = vmatpush1.msra.mxu0 %v79
    %242 = vmatprep.subr.mxu0 0.0
    %243 = vmatpush1.msra.mxu0 %v80
    %244 = vmatprep.subr.mxu0 0.0
    %245 = vmatpush1.msra.mxu0 %v81
    %246 = vmatprep.subr.mxu0 0.0
    %247 = vmatpush1.msra.mxu0 %v82
    %248 = vmatprep.subr.mxu0 0.0
    %249 = vmatpush1.msra.mxu0 %v83
    %250 = vmatprep.subr.mxu0 0.0
    %251 = vmatpush1.msra.mxu0 %v84
    %252 = vmatprep.subr.mxu0 0.0
    %253 = vmatpush1.msra.mxu0 %v85
    %254 = vmatprep.subr.mxu0 0.0
    %255 = vmatpush1.msra.mxu0 %v86
    %256 = vmatprep.subr.mxu0 0.0
    %257 = vmatpush1.msra.mxu0 %v87
    %258 = vmatprep.subr.mxu0 0.0
    %259 = vmatpush1.msra.mxu0 %v88
    %260 = vmatprep.subr.mxu0 0.0
    %261 = vmatpush1.msra.mxu0 %v89
    %262 = vmatprep.subr.mxu0 0.0
    %263 = vmatpush1.msra.mxu0 %v90
    %264 = vmatprep.subr.mxu0 0.0
    %265 = vmatpush1.msra.mxu0 %v91
    %266 = vmatprep.subr.mxu0 0.0
    %267 = vmatpush1.msra.mxu0 %v92
    %268 = vmatprep.subr.mxu0 0.0
    %269 = vmatpush1.msra.mxu0 %v93
    %270 = vmatprep.subr.mxu0 0.0
    %271 = vmatpush1.msra.mxu0 %v94
    %272 = vmatprep.mubr.f32.mxu0 %v27
    %273 = vmatmul.mubr.f32.gmra.mrb[0].mxu0 %v26
    %v274 = vpop.f32.mrb[0].mxu0
    %v275 = vadd.f32 %v205, %v274
    %v276 = vpop.f32.mrb[0].mxu0
    %277 = vdwg.mxu0
    %278 = vmatprep.subr.mxu0 0.0
    %279 = vmatpush1.msra.mxu0 %v95
    %280 = vmatprep.subr.mxu0 0.0
    %281 = vmatpush1.msra.mxu0 %v96
    %282 = vmatprep.subr.mxu0 0.0
    %283 = vmatpush1.msra.mxu0 %v97
    %284 = vmatprep.subr.mxu0 0.0
    %285 = vmatpush1.msra.mxu0 %v98
    %286 = vmatprep.subr.mxu0 0.0
    %287 = vmatpush1.msra.mxu0 %v99
    %288 = vmatprep.subr.mxu0 0.0
    %289 = vmatpush1.msra.mxu0 %v100
    %290 = vmatprep.subr.mxu0 0.0
    %291 = vmatpush1.msra.mxu0 %v101
    %292 = vmatprep.subr.mxu0 0.0
    %293 = vmatpush1.msra.mxu0 %v102
    %294 = vmatprep.subr.mxu0 0.0
    %295 = vmatpush1.msra.mxu0 %v103
    %296 = vmatprep.subr.mxu0 0.0
    %297 = vmatpush1.msra.mxu0 %v104
    %298 = vmatprep.subr.mxu0 0.0
    %299 = vmatpush1.msra.mxu0 %v105
    %300 = vmatprep.subr.mxu0 0.0
    %301 = vmatpush1.msra.mxu0 %v106
    %302 = vmatprep.subr.mxu0 0.0
    %303 = vmatpush1.msra.mxu0 %v107
    %304 = vmatprep.subr.mxu0 0.0
    %305 = vmatpush1.msra.mxu0 %v108
    %306 = vmatprep.subr.mxu0 0.0
    %307 = vmatpush1.msra.mxu0 %v109
    %308 = vmatprep.subr.mxu0 0.0
    %309 = vmatpush1.msra.mxu0 %v110
    %310 = vmatprep.subr.mxu0 0.0
    %311 = vmatpush1.msra.mxu0 %v111
    %312 = vmatprep.subr.mxu0 0.0
    %313 = vmatpush1.msra.mxu0 %v112
    %314 = vmatprep.subr.mxu0 0.0
    %315 = vmatpush1.msra.mxu0 %v113
    %316 = vmatprep.subr.mxu0 0.0
    %317 = vmatpush1.msra.mxu0 %v114
    %318 = vmatprep.subr.mxu0 0.0
    %319 = vmatpush1.msra.mxu0 %v115
    %320 = vmatprep.subr.mxu0 0.0
    %321 = vmatpush1.msra.mxu0 %v116
    %322 = vmatprep.subr.mxu0 0.0
    %323 = vmatpush1.msra.mxu0 %v117
    %324 = vmatprep.subr.mxu0 0.0
    %325 = vmatpush1.msra.mxu0 %v118
    %326 = vmatprep.subr.mxu0 0.0
    %327 = vmatpush1.msra.mxu0 %v119
    %328 = vmatprep.subr.mxu0 0.0
    %329 = vmatpush1.msra.mxu0 %v120
    %330 = vmatprep.subr.mxu0 0.0
    %331 = vmatpush1.msra.mxu0 %v121
    %332 = vmatprep.subr.mxu0 0.0
    %333 = vmatpush1.msra.mxu0 %v122
    %334 = vmatprep.subr.mxu0 0.0
    %335 = vmatpush1.msra.mxu0 %v123
    %336 = vmatprep.subr.mxu0 0.0
    %337 = vmatpush1.msra.mxu0 %v124
    %338 = vmatprep.subr.mxu0 0.0
    %339 = vmatpush1.msra.mxu0 %v125
    %340 = vmatprep.subr.mxu0 0.0
    %341 = vmatpush1.msra.mxu0 %v126
    %342 = vmatprep.mubr.f32.mxu0 %v29
    %343 = vmatmul.mubr.f32.gmra.mrb[0].mxu0 %v28
    %v344 = vpop.f32.mrb[0].mxu0
    %v345 = vadd.f32 %v275, %v344
    %v346 = vpop.f32.mrb[0].mxu0
    %347 = vdwg.mxu0
    %348 = vmatprep.subr.mxu0 0.0
    %349 = vmatpush1.msra.mxu0 %v127
    %350 = vmatprep.subr.mxu0 0.0
    %351 = vmatpush1.msra.mxu0 %v128
    %352 = vmatprep.subr.mxu0 0.0
    %353 = vmatpush1.msra.mxu0 0.0
    %354 = vmatprep.subr.mxu0 0.0
    %355 = vmatpush1.msra.mxu0 0.0
    %356 = vmatprep.subr.mxu0 0.0
    %357 = vmatpush1.msra.mxu0 0.0
    %358 = vmatprep.subr.mxu0 0.0
    %359 = vmatpush1.msra.mxu0 0.0
    %360 = vmatprep.subr.mxu0 0.0
    %361 = vmatpush1.msra.mxu0 0.0
    %362 = vmatprep.subr.mxu0 0.0
    %363 = vmatpush1.msra.mxu0 0.0
    %364 = vmatprep.subr.mxu0 0.0
    %365 = vmatpush1.msra.mxu0 0.0
    %366 = vmatprep.subr.mxu0 0.0
    %367 = vmatpush1.msra.mxu0 0.0
    %368 = vmatprep.subr.mxu0 0.0
    %369 = vmatpush1.msra.mxu0 0.0
    %370 = vmatprep.subr.mxu0 0.0
    %371 = vmatpush1.msra.mxu0 0.0
    %372 = vmatprep.subr.mxu0 0.0
    %373 = vmatpush1.msra.mxu0 0.0
    %374 = vmatprep.subr.mxu0 0.0
    %375 = vmatpush1.msra.mxu0 0.0
    %376 = vmatprep.subr.mxu0 0.0
    %377 = vmatpush1.msra.mxu0 0.0
    %378 = vmatprep.subr.mxu0 0.0
    %379 = vmatpush1.msra.mxu0 0.0
    %380 = vmatprep.subr.mxu0 0.0
    %381 = vmatpush1.msra.mxu0 0.0
    %382 = vmatprep.subr.mxu0 0.0
    %383 = vmatpush1.msra.mxu0 0.0
    %384 = vmatprep.subr.mxu0 0.0
    %385 = vmatpush1.msra.mxu0 0.0
    %386 = vmatprep.subr.mxu0 0.0
    %387 = vmatpush1.msra.mxu0 0.0
    %388 = vmatprep.subr.mxu0 0.0
    %389 = vmatpush1.msra.mxu0 0.0
    %390 = vmatprep.subr.mxu0 0.0
    %391 = vmatpush1.msra.mxu0 0.0
    %392 = vmatprep.subr.mxu0 0.0
    %393 = vmatpush1.msra.mxu0 0.0
    %394 = vmatprep.subr.mxu0 0.0
    %395 = vmatpush1.msra.mxu0 0.0
    %396 = vmatprep.subr.mxu0 0.0
    %397 = vmatpush1.msra.mxu0 0.0
    %398 = vmatprep.subr.mxu0 0.0
    %399 = vmatpush1.msra.mxu0 0.0
    %400 = vmatprep.subr.mxu0 0.0
    %401 = vmatpush1.msra.mxu0 0.0
    %402 = vmatprep.subr.mxu0 0.0
    %403 = vmatpush1.msra.mxu0 0.0
    %404 = vmatprep.subr.mxu0 0.0
    %405 = vmatpush1.msra.mxu0 0.0
    %406 = vmatprep.subr.mxu0 0.0
    %407 = vmatpush1.msra.mxu0 0.0
    %408 = vmatprep.subr.mxu0 0.0
    %409 = vmatpush1.msra.mxu0 0.0
    %410 = vmatprep.subr.mxu0 0.0
    %411 = vmatpush1.msra.mxu0 0.0
    %412 = vmatprep.mubr.f32.mxu0 0.0
    %413 = vmatmul.mubr.f32.gmra.mrb[0].mxu0 %v136
    %v414 = vpop.f32.mrb[0].mxu0
    %v415 = vadd.f32 %v345, %v414
    %v416 = vpop.f32.mrb[0].mxu0
    %417 = vdwg.mxu0
    %v418 = vmax.f32 %v415, 0.0
    %v419 = vld [vmem:[%s2] sm:$0xff]
    %v420 = vld [vmem:[%s2 + $0x8] sm:$0xff]
    %v421 = vld [vmem:[%s2 + $0x10] sm:$0xff]
    %v422 = vld [vmem:[%s2 + $0x18] sm:$0xff]
    %v423 = vld [vmem:[%s2 + $0x20] sm:$0xff]
    %v424 = vld [vmem:[%s2 + $0x28] sm:$0xff]
    %v425 = vld [vmem:[%s2 + $0x30] sm:$0xff]
    %v426 = vld [vmem:[%s2 + $0x38] sm:$0xff]
    %v427 = vld [vmem:[%s2 + $0x40] sm:$0xff]
    %v428 = vld [vmem:[%s2 + $0x48] sm:$0xff]
    %v429 = vld [vmem:[%s2 + $0x50] sm:$0xff]
    %v430 = vld [vmem:[%s2 + $0x58] sm:$0xff]
    %v431 = vld [vmem:[%s2 + $0x60] sm:$0xff]
    %v432 = vld [vmem:[%s2 + $0x68] sm:$0xff]
    %v433 = vld [vmem:[%s2 + $0x70] sm:$0xff]
    %v434 = vld [vmem:[%s2 + $0x78] sm:$0xff]
    %v435 = vld [vmem:[%s5 + $0x1] sm:$0x1]
    %v436 = vlaneseq
    %v437 = vshrl.u32 %v436, 7
    %v438 = vsub.s32 0, %v437
    %v439 = vrot.slane %v435, %v438
    %440 = vmatprep.subr.mxu0 0.0
    %441 = vmatpush1.msra.mxu0 %v419
    %442 = vmatprep.subr.mxu0 0.0
    %443 = vmatpush1.msra.mxu0 %v420
    %444 = vmatprep.subr.mxu0 0.0
    %445 = vmatpush1.msra.mxu0 %v421
    %446 = vmatprep.subr.mxu0 0.0
    %447 = vmatpush1.msra.mxu0 %v422
    %448 = vmatprep.subr.mxu0 0.0
    %449 = vmatpush1.msra.mxu0 %v423
    %450 = vmatprep.subr.mxu0 0.0
    %451 = vmatpush1.msra.mxu0 %v424
    %452 = vmatprep.subr.mxu0 0.0
    %453 = vmatpush1.msra.mxu0 %v425
    %454 = vmatprep.subr.mxu0 0.0
    %455 = vmatpush1.msra.mxu0 %v426
    %456 = vmatprep.subr.mxu0 0.0
    %457 = vmatpush1.msra.mxu0 %v427
    %458 = vmatprep.subr.mxu0 0.0
    %459 = vmatpush1.msra.mxu0 %v428
    %460 = vmatprep.subr.mxu0 0.0
    %461 = vmatpush1.msra.mxu0 %v429
    %462 = vmatprep.subr.mxu0 0.0
    %463 = vmatpush1.msra.mxu0 %v430
    %464 = vmatprep.subr.mxu0 0.0
    %465 = vmatpush1.msra.mxu0 %v431
    %466 = vmatprep.subr.mxu0 0.0
    %467 = vmatpush1.msra.mxu0 %v432
    %468 = vmatprep.subr.mxu0 0.0
    %469 = vmatpush1.msra.mxu0 %v433
    %470 = vmatprep.subr.mxu0 0.0
    %471 = vmatpush1.msra.mxu0 %v434
    %472 = vmatprep.subr.mxu0 0.0
    %473 = vmatpush1.msra.mxu0 0.0
    %474 = vmatprep.subr.mxu0 0.0
    %475 = vmatpush1.msra.mxu0 0.0
    %476 = vmatprep.subr.mxu0 0.0
    %477 = vmatpush1.msra.mxu0 0.0
    %478 = vmatprep.subr.mxu0 0.0
    %479 = vmatpush1.msra.mxu0 0.0
    %480 = vmatprep.subr.mxu0 0.0
    %481 = vmatpush1.msra.mxu0 0.0
    %482 = vmatprep.subr.mxu0 0.0
    %483 = vmatpush1.msra.mxu0 0.0
    %484 = vmatprep.subr.mxu0 0.0
    %485 = vmatpush1.msra.mxu0 0.0
    %486 = vmatprep.subr.mxu0 0.0
    %487 = vmatpush1.msra.mxu0 0.0
    %488 = vmatprep.subr.mxu0 0.0
    %489 = vmatpush1.msra.mxu0 0.0
    %490 = vmatprep.subr.mxu0 0.0
    %491 = vmatpush1.msra.mxu0 0.0
    %492 = vmatprep.subr.mxu0 0.0
    %493 = vmatpush1.msra.mxu0 0.0
    %494 = vmatprep.subr.mxu0 0.0
    %495 = vmatpush1.msra.mxu0 0.0
    %496 = vmatprep.subr.mxu0 0.0
    %497 = vmatpush1.msra.mxu0 0.0
    %498 = vmatprep.subr.mxu0 0.0
    %499 = vmatpush1.msra.mxu0 0.0
    %500 = vmatprep.subr.mxu0 0.0
    %501 = vmatpush1.msra.mxu0 0.0
    %502 = vmatprep.subr.mxu0 0.0
    %503 = vmatpush1.msra.mxu0 0.0
    %504 = vmatprep.mubr.f32.mxu0 0.0
    %505 = vmatmul.mubr.f32.gmra.mrb[0].mxu0 %v418
    %v506 = vpop.f32.mrb[0].mxu0
    %v507 = vadd.f32 %v439, %v506
    %v508 = vpop.f32.mrb[0].mxu0
    %509 = vdwg.mxu0
    %v510 = vmax.f32 %v507, 0.0
    %v511 = vld [vmem:[%s3] sm:$0xff]
    %v512 = vld [vmem:[%s3 + $0x8] sm:$0xff]
    %v513 = vld [vmem:[%s3 + $0x10] sm:$0xff]
    %v514 = vld [vmem:[%s3 + $0x18] sm:$0xff]
    %v515 = vld [vmem:[%s3 + $0x20] sm:$0xff]
    %v516 = vld [vmem:[%s3 + $0x28] sm:$0xff]
    %v517 = vld [vmem:[%s3 + $0x30] sm:$0xff]
    %v518 = vld [vmem:[%s3 + $0x38] sm:$0xff]
    %v519 = vld [vmem:[%s3 + $0x40] sm:$0xff]
    %v520 = vld [vmem:[%s3 + $0x48] sm:$0xff]
    %v521 = vld [vmem:[%s3 + $0x50] sm:$0xff]
    %v522 = vld [vmem:[%s3 + $0x58] sm:$0xff]
    %v523 = vld [vmem:[%s3 + $0x60] sm:$0xff]
    %v524 = vld [vmem:[%s3 + $0x68] sm:$0xff]
    %v525 = vld [vmem:[%s3 + $0x70] sm:$0xff]
    %v526 = vld [vmem:[%s3 + $0x78] sm:$0xff]
    %v527 = vld [vmem:[%s5 + $0x2] sm:$0x1]
    %v528 = vlaneseq
    %v529 = vshrl.u32 %v528, 7
    %v530 = vsub.s32 0, %v529
    %v531 = vrot.slane %v527, %v530
    %532 = vmatprep.subr.mxu0 0.0
    %533 = vmatpush1.msra.mxu0 %v511
    %534 = vmatprep.subr.mxu0 0.0
    %535 = vmatpush1.msra.mxu0 %v512
    %536 = vmatprep.subr.mxu0 0.0
    %537 = vmatpush1.msra.mxu0 %v513
    %538 = vmatprep.subr.mxu0 0.0
    %539 = vmatpush1.msra.mxu0 %v514
    %540 = vmatprep.subr.mxu0 0.0
    %541 = vmatpush1.msra.mxu0 %v515
    %542 = vmatprep.subr.mxu0 0.0
    %543 = vmatpush1.msra.mxu0 %v516
    %544 = vmatprep.subr.mxu0 0.0
    %545 = vmatpush1.msra.mxu0 %v517
    %546 = vmatprep.subr.mxu0 0.0
    %547 = vmatpush1.msra.mxu0 %v518
    %548 = vmatprep.subr.mxu0 0.0
    %549 = vmatpush1.msra.mxu0 %v519
    %550 = vmatprep.subr.mxu0 0.0
    %551 = vmatpush1.msra.mxu0 %v520
    %552 = vmatprep.subr.mxu0 0.0
    %553 = vmatpush1.msra.mxu0 %v521
    %554 = vmatprep.subr.mxu0 0.0
    %555 = vmatpush1.msra.mxu0 %v522
    %556 = vmatprep.subr.mxu0 0.0
    %557 = vmatpush1.msra.mxu0 %v523
    %558 = vmatprep.subr.mxu0 0.0
    %559 = vmatpush1.msra.mxu0 %v524
    %560 = vmatprep.subr.mxu0 0.0
    %561 = vmatpush1.msra.mxu0 %v525
    %562 = vmatprep.subr.mxu0 0.0
    %563 = vmatpush1.msra.mxu0 %v526
    %564 = vmatprep.subr.mxu0 0.0
    %565 = vmatpush1.msra.mxu0 0.0
    %566 = vmatprep.subr.mxu0 0.0
    %567 = vmatpush1.msra.mxu0 0.0
    %568 = vmatprep.subr.mxu0 0.0
    %569 = vmatpush1.msra.mxu0 0.0
    %570 = vmatprep.subr.mxu0 0.0
    %571 = vmatpush1.msra.mxu0 0.0
    %572 = vmatprep.subr.mxu0 0.0
    %573 = vmatpush1.msra.mxu0 0.0
    %574 = vmatprep.subr.mxu0 0.0
    %575 = vmatpush1.msra.mxu0 0.0
    %576 = vmatprep.subr.mxu0 0.0
    %577 = vmatpush1.msra.mxu0 0.0
    %578 = vmatprep.subr.mxu0 0.0
    %579 = vmatpush1.msra.mxu0 0.0
    %580 = vmatprep.subr.mxu0 0.0
    %581 = vmatpush1.msra.mxu0 0.0
    %582 = vmatprep.subr.mxu0 0.0
    %583 = vmatpush1.msra.mxu0 0.0
    %584 = vmatprep.subr.mxu0 0.0
    %585 = vmatpush1.msra.mxu0 0.0
    %586 = vmatprep.subr.mxu0 0.0
    %587 = vmatpush1.msra.mxu0 0.0
    %588 = vmatprep.subr.mxu0 0.0
    %589 = vmatpush1.msra.mxu0 0.0
    %590 = vmatprep.subr.mxu0 0.0
    %591 = vmatpush1.msra.mxu0 0.0
    %592 = vmatprep.subr.mxu0 0.0
    %593 = vmatpush1.msra.mxu0 0.0
    %594 = vmatprep.subr.mxu0 0.0
    %595 = vmatpush1.msra.mxu0 0.0
    %596 = vmatprep.mubr.f32.mxu0 0.0
    %597 = vmatmul.mubr.f32.gmra.mrb[0].mxu0 %v510
    %v598 = vpop.f32.mrb[0].mxu0
    %v599 = vadd.f32 %v531, %v598
    %v600 = vpop.f32.mrb[0].mxu0
    %601 = vdwg.mxu0
    %v602 = vmax.f32 %v599, 0.0
    %v603 = vld [vmem:[%s4] sm:$0xff]
    %v604 = vld [vmem:[%s4 + $0x8] sm:$0xff]
    %v605 = vld [vmem:[%s4 + $0x10] sm:$0xff]
    %v606 = vld [vmem:[%s4 + $0x18] sm:$0xff]
    %v607 = vld [vmem:[%s4 + $0x20] sm:$0xff]
    %v608 = vld [vmem:[%s4 + $0x28] sm:$0xff]
    %v609 = vld [vmem:[%s4 + $0x30] sm:$0xff]
    %v610 = vld [vmem:[%s4 + $0x38] sm:$0xff]
    %v611 = vld [vmem:[%s4 + $0x40] sm:$0xff]
    %v612 = vld [vmem:[%s4 + $0x48] sm:$0xff]
    %v613 = vld [vmem:[%s4 + $0x50] sm:$0xff]
    %v614 = vld [vmem:[%s4 + $0x58] sm:$0xff]
    %v615 = vld [vmem:[%s4 + $0x60] sm:$0xff]
    %v616 = vld [vmem:[%s4 + $0x68] sm:$0xff]
    %v617 = vld [vmem:[%s4 + $0x70] sm:$0xff]
    %v618 = vld [vmem:[%s4 + $0x78] sm:$0xff]
    %v619 = vld [vmem:[%s5 + $0x3] sm:$0x1]
    %v620 = vlaneseq
    %v621 = vshrl.u32 %v620, 7
    %v622 = vsub.s32 0, %v621
    %v623 = vrot.slane %v619, %v622
    %624 = vmatprep.subr.mxu0 0.0
    %625 = vmatpush1.msra.mxu0 %v603
    %626 = vmatprep.subr.mxu0 0.0
    %627 = vmatpush1.msra.mxu0 %v604
    %628 = vmatprep.subr.mxu0 0.0
    %629 = vmatpush1.msra.mxu0 %v605
    %630 = vmatprep.subr.mxu0 0.0
    %631 = vmatpush1.msra.mxu0 %v606
    %632 = vmatprep.subr.mxu0 0.0
    %633 = vmatpush1.msra.mxu0 %v607
    %634 = vmatprep.subr.mxu0 0.0
    %635 = vmatpush1.msra.mxu0 %v608
    %636 = vmatprep.subr.mxu0 0.0
    %637 = vmatpush1.msra.mxu0 %v609
    %638 = vmatprep.subr.mxu0 0.0
    %639 = vmatpush1.msra.mxu0 %v610
    %640 = vmatprep.subr.mxu0 0.0
    %641 = vmatpush1.msra.mxu0 %v611
    %642 = vmatprep.subr.mxu0 0.0
    %643 = vmatpush1.msra.mxu0 %v612
    %644 = vmatprep.subr.mxu0 0.0
    %645 = vmatpush1.msra.mxu0 %v613
    %646 = vmatprep.subr.mxu0 0.0
    %647 = vmatpush1.msra.mxu0 %v614
    %648 = vmatprep.subr.mxu0 0.0
    %649 = vmatpush1.msra.mxu0 %v615
    %650 = vmatprep.subr.mxu0 0.0
    %651 = vmatpush1.msra.mxu0 %v616
    %652 = vmatprep.subr.mxu0 0.0
    %653 = vmatpush1.msra.mxu0 %v617
    %654 = vmatprep.subr.mxu0 0.0
    %655 = vmatpush1.msra.mxu0 %v618
    %656 = vmatprep.subr.mxu0 0.0
    %657 = vmatpush1.msra.mxu0 0.0
    %658 = vmatprep.subr.mxu0 0.0
    %659 = vmatpush1.msra.mxu0 0.0
    %660 = vmatprep.subr.mxu0 0.0
    %661 = vmatpush1.msra.mxu0 0.0
    %662 = vmatprep.subr.mxu0 0.0
    %663 = vmatpush1.msra.mxu0 0.0
    %664 = vmatprep.subr.mxu0 0.0
    %665 = vmatpush1.msra.mxu0 0.0
    %666 = vmatprep.subr.mxu0 0.0
    %667 = vmatpush1.msra.mxu0 0.0
    %668 = vmatprep.subr.mxu0 0.0
    %669 = vmatpush1.msra.mxu0 0.0
    %670 = vmatprep.subr.mxu0 0.0
    %671 = vmatpush1.msra.mxu0 0.0
    %672 = vmatprep.subr.mxu0 0.0
    %673 = vmatpush1.msra.mxu0 0.0
    %674 = vmatprep.subr.mxu0 0.0
    %675 = vmatpush1.msra.mxu0 0.0
    %676 = vmatprep.subr.mxu0 0.0
    %677 = vmatpush1.msra.mxu0 0.0
    %678 = vmatprep.subr.mxu0 0.0
    %679 = vmatpush1.msra.mxu0 0.0
    %680 = vmatprep.subr.mxu0 0.0
    %681 = vmatpush1.msra.mxu0 0.0
    %682 = vmatprep.subr.mxu0 0.0
    %683 = vmatpush1.msra.mxu0 0.0
    %684 = vmatprep.subr.mxu0 0.0
    %685 = vmatpush1.msra.mxu0 0.0
    %686 = vmatprep.subr.mxu0 0.0
    %687 = vmatpush1.msra.mxu0 0.0
    %688 = vmatprep.mubr.f32.mxu0 0.0
    %689 = vmatmul.mubr.f32.gmra.mrb[0].mxu0 %v602
    %v690 = vpop.f32.mrb[0].mxu0
    %v691 = vadd.f32 %v623, %v690
    %v692 = vpop.f32.mrb[0].mxu0
    %693 = vdwg.mxu0
    %v694 = vmax.f32 %v691, 0.0
    %695 = vst [vmem:[#allocation2] sm:$0xff] %v694
    // Predicated region
    $region26: #{custom_net_forward.1} parent=1 // pred_check
      _
    $region27: #{custom_net_forward.1} parent=1 // pred_check_branch
      %697 = sbr.rel (0) target = $region29
    $region28: #{custom_net_forward.1} parent=1 // pred_region
      %s699 = ssub.s32 128, 128
      %700 = vsyncadd [#allocation3], %s699
      %s702 = sshll.u32 [#allocation2], 4
      %s703 = int_to_ptr.vmem [resolvable:$true] %s702
      %705 = dma.vmem_to_hbm [thread:$0]  %s703, 128, %s6, [#allocation3]
    $region29: #{custom_net_forward.1} parent=1 // pred_fallthru
      _
    // Predicated region
    $region30: #{custom_net_forward.1} parent=1 // pred_check
      _
    $region31: #{custom_net_forward.1} parent=1 // pred_check_branch
      %707 = sbr.rel (0) target = $region33
    $region32: #{custom_net_forward.1} parent=1 // pred_region
      %708 = dma.done [#allocation3], 128
    $region33: #{custom_net_forward.1} parent=1 // pred_fallthru
      _
    %709 = vsyncpa [#allocation3], 1

</llo_original>
